<compile_context>
chip_gen: v7x
topology: tpu7x:2x2x1
jax: 0.10.0
libtpu: 0.0.40
codegen_flags: <defaults>
</compile_context>

<pallas_src>
import jax
import jax.numpy as jnp
from jax import lax
from jax.experimental import pallas as pl
from jax.experimental.pallas import tpu as pltpu


def _hardswish(x):
    return x * jnp.clip(x + 3.0, 0.0, 6.0) * (1.0 / 6.0)


def skunit_kernel(x_ref, wst_ref, b3_ref, b5_ref, wfc_ref, bfc_ref, wab_ref,
                  out_ref):
    x = x_ref[0]                                   # (C, L) bf16
    C, L = x.shape

    # --- both conv branches, all 6 taps, in a single MXU dot ----------------
    # wst rows [t*C:(t+1)*C] hold tap t: t=0..2 -> k3 branch, t=3..5 -> dilated.
    y = jnp.dot(wst_ref[...], x, preferred_element_type=jnp.float32)  # (6C, L)

    col = lax.broadcasted_iota(jnp.int32, (C, L), 1)

    def tap(t, sh):
        # contribution of tap t: out[:, l] += y_t[:, l + sh] (zero out of range)
        blk = y[t * C:(t + 1) * C, :]
        if sh == 0:
            return blk
        r = pltpu.roll(blk, shift=(-sh) % L, axis=1)   # r[:, l] = blk[:, l+sh]
        if sh > 0:
            return jnp.where(col < L - sh, r, 0.0)
        return jnp.where(col >= -sh, r, 0.0)

    # BN scale already folded into wst; only the bias remains.
    u3 = _hardswish(tap(0, -1) + tap(1, 0) + tap(2, 1) + b3_ref[...])
    u5 = _hardswish(tap(3, -2) + tap(4, 0) + tap(5, 2) + b5_ref[...])

    # --- squeeze + fc + 2-way softmax gate expressed as a sigmoid ------------
    s = jnp.mean(u3 + u5, axis=1, keepdims=True)                       # (C, 1)
    z = jnp.dot(wfc_ref[...], s, preferred_element_type=jnp.float32)   # (d, 1)
    z = _hardswish(z + bfc_ref[...])
    t = jnp.dot(wab_ref[...], z, preferred_element_type=jnp.float32)   # (C, 1)
    a = pl.reciprocal(1.0 + jnp.exp(-t), approx=True)  # sigmoid((A-B) z)

    out_ref[0] = u5 + a * (u3 - u5)                 # == a*u3 + (1-a)*u5


def _prep_params(p):
    """Fold BN scales into weights, build the stacked conv weight, cast bf16."""
    C = p["w3"].shape[0]
    w3b = (p["w3"] * p["s3"].reshape(C, 1, 1)).astype(jnp.bfloat16)   # (C, C, 3)
    w5b = (p["w5"] * p["s5"].reshape(C, 1, 1)).astype(jnp.bfloat16)
    wst = jnp.concatenate([w3b[:, :, k] for k in range(3)]
                          + [w5b[:, :, k] for k in range(3)], axis=0)  # (6C, C)
    wfc = (p["sfc"] * p["wfc"]).astype(jnp.float32)                    # (d, C)
    wab = (p["wa"] - p["wb"]).astype(jnp.float32)                      # (C, d)
    return dict(w3b=w3b, w5b=w5b, wst=wst, b3=p["b3"], b5=p["b5"],
                wfc=wfc, bfc=p["bfc"], wab=wab)


def skunit_forward(x, p):
    N, C, L = x.shape
    q = _prep_params(p)
    d = q["wfc"].shape[0]
    xb = x.astype(jnp.bfloat16)          # bf16 at the HBM boundary

    def full(shape):
        return pl.BlockSpec(shape, lambda n, _s=shape: (0,) * len(_s))

    return pl.pallas_call(
        skunit_kernel,
        out_shape=jax.ShapeDtypeStruct((N, C, L), jnp.float32),
        grid_spec=pltpu.PrefetchScalarGridSpec(
            num_scalar_prefetch=0,
            grid=(N,),
            in_specs=[
                pl.BlockSpec((1, C, L), lambda n: (n, 0, 0)),   # x
                full((6 * C, C)),                               # stacked conv W
                full((C, 1)), full((C, 1)),                     # b3, b5
                full((d, C)), full((d, 1)),                     # wfc (scaled), bfc
                full((C, d)),                                   # wa - wb
            ],
            out_specs=pl.BlockSpec((1, C, L), lambda n: (n, 0, 0)),
        ),
        compiler_params=pltpu.CompilerParams(
            dimension_semantics=("parallel",)),
    )(xb, q["wst"], q["b3"], q["b5"], q["wfc"], q["bfc"], q["wab"])


def _fold_bn(gamma, beta, mean, var, eps=1e-5):
    scale = gamma / jnp.sqrt(var + eps)
    bias = beta - mean * scale
    return scale[:, None].astype(jnp.float32), bias[:, None].astype(jnp.float32)


def make_params(in_channels, r=4, L_min=8, key=jax.random.PRNGKey(0)):
    d = max(int(in_channels / r), L_min)
    ks = jax.random.split(key, 12)
    C = in_channels
    # conv weights (PyTorch layout: out, in, kW), no bias
    w3 = 0.25 * jax.random.normal(ks[0], (C, C, 3), jnp.float32)
    w5 = 0.25 * jax.random.normal(ks[1], (C, C, 3), jnp.float32)
    wfc = 0.25 * jax.random.normal(ks[2], (d, C), jnp.float32)
    wa = 0.25 * jax.random.normal(ks[3], (C, d), jnp.float32)
    wb = 0.25 * jax.random.normal(ks[4], (C, d), jnp.float32)
    # BatchNorm (inference mode: running_mean=0, running_var=1)
    g3 = 1.0 + 0.1 * jax.random.normal(ks[5], (C,), jnp.float32)
    b3 = 0.1 * jax.random.normal(ks[6], (C,), jnp.float32)
    g5 = 1.0 + 0.1 * jax.random.normal(ks[7], (C,), jnp.float32)
    b5 = 0.1 * jax.random.normal(ks[8], (C,), jnp.float32)
    gf = 1.0 + 0.1 * jax.random.normal(ks[9], (d,), jnp.float32)
    bf = 0.1 * jax.random.normal(ks[10], (d,), jnp.float32)
    zc, oc = jnp.zeros((C,), jnp.float32), jnp.ones((C,), jnp.float32)
    zd, od = jnp.zeros((d,), jnp.float32), jnp.ones((d,), jnp.float32)
    s3, bb3 = _fold_bn(g3, b3, zc, oc)
    s5, bb5 = _fold_bn(g5, b5, zc, oc)
    sf, bbf = _fold_bn(gf, bf, zd, od)
    return dict(w3=w3, w5=w5, wfc=wfc, wa=wa, wb=wb,
                s3=s3, b3=bb3, s5=s5, b5=bb5, sfc=sf, bfc=bbf)


def reference(x, p):
    """Pure-JAX reference with the original SKUnit formulation (exp-ratio gate)."""
    q = _prep_params(p)
    xb = x.astype(jnp.bfloat16)
    dn = ("NCH", "OIH", "NCH")
    u3 = lax.conv_general_dilated(xb, q["w3b"], (1,), [(1, 1)],
                                  rhs_dilation=(1,), dimension_numbers=dn,
                                  preferred_element_type=jnp.float32)
    u3 = _hardswish(u3 + q["b3"][None])
    u5 = lax.conv_general_dilated(xb, q["w5b"], (1,), [(2, 2)],
                                  rhs_dilation=(2,), dimension_numbers=dn,
                                  preferred_element_type=jnp.float32)
    u5 = _hardswish(u5 + q["b5"][None])
    s = jnp.mean(u3 + u5, axis=2, keepdims=True)                      # (N, C, 1)
    z = _hardswish(jnp.einsum("dc,ncl->ndl", q["wfc"], s) + q["bfc"][None])
    eaz = jnp.exp(jnp.einsum("cd,ndl->ncl", p["wa"], z))
    ebz = jnp.exp(jnp.einsum("cd,ndl->ncl", p["wb"], z))
    a = eaz / (eaz + ebz)
    b = ebz / (eaz + ebz)
    return a * u3 + b * u5


if __name__ == "__main__":
    N, C, L = 2, 8, 128
    key = jax.random.PRNGKey(0)
    kx, kp = jax.random.split(key)
    x = jax.random.normal(kx, (N, C, L), jnp.float32)
    params = make_params(in_channels=C, r=4, L_min=8, key=kp)

    out = jax.block_until_ready(skunit_forward(x, params))
    ref = jax.block_until_ready(reference(x, params))

    assert out.shape == (N, C, L)
    err = float(jnp.max(jnp.abs(out - ref)))
    # bf16 MXU tolerance (both kernel and reference use bf16 conv operands).
    assert jnp.allclose(out, ref, rtol=2e-2, atol=2e-2), err
    print("KERNEL_OK")
</pallas_src>

<mosaic_0001>
module attributes {stable_mosaic.version = 11 : i64} {
  func.func @skunit_kernel(%arg0: i32, %arg1: memref<1x8x128xbf16, #tpu.memory_space<vmem>>, %arg2: memref<48x8xbf16, #tpu.memory_space<vmem>>, %arg3: memref<8x1xf32, #tpu.memory_space<vmem>>, %arg4: memref<8x1xf32, #tpu.memory_space<vmem>>, %arg5: memref<8x8xf32, #tpu.memory_space<vmem>>, %arg6: memref<8x1xf32, #tpu.memory_space<vmem>>, %arg7: memref<8x8xf32, #tpu.memory_space<vmem>>, %arg8: memref<1x8x128xf32, #tpu.memory_space<vmem>>) attributes {dimension_semantics = [#tpu.dimension_semantics<parallel>], iteration_bounds = array<i64: 2>, scalar_prefetch = 0 : i64, scratch_operands = 0 : i64, tpu.core_type = #tpu.core_type<tc>, window_params = [{transform_indices = @transform_0, window_bounds = array<i64: 1, 8, 128>}, {pipeline_mode = #tpu.pipeline_mode<synchronous>, transform_indices = @transform_1, window_bounds = array<i64: 48, 8>}, {pipeline_mode = #tpu.pipeline_mode<synchronous>, transform_indices = @transform_2, window_bounds = array<i64: 8, 1>}, {pipeline_mode = #tpu.pipeline_mode<synchronous>, transform_indices = @transform_3, window_bounds = array<i64: 8, 1>}, {pipeline_mode = #tpu.pipeline_mode<synchronous>, transform_indices = @transform_4, window_bounds = array<i64: 8, 8>}, {pipeline_mode = #tpu.pipeline_mode<synchronous>, transform_indices = @transform_5, window_bounds = array<i64: 8, 1>}, {pipeline_mode = #tpu.pipeline_mode<synchronous>, transform_indices = @transform_6, window_bounds = array<i64: 8, 8>}, {transform_indices = @transform_7, window_bounds = array<i64: 1, 8, 128>}]} {
    %c0 = arith.constant 0 : index
    %c0_0 = arith.constant 0 : index
    %c0_1 = arith.constant 0 : index
    %0 = vector.load %arg1[%c0, %c0_0, %c0_1] : memref<1x8x128xbf16, #tpu.memory_space<vmem>>, vector<1x8x128xbf16>
    %1 = vector.shape_cast %0 : vector<1x8x128xbf16> to vector<8x128xbf16>
    %c0_2 = arith.constant 0 : index
    %c0_3 = arith.constant 0 : index
    %2 = vector.load %arg2[%c0_2, %c0_3] : memref<48x8xbf16, #tpu.memory_space<vmem>>, vector<48x8xbf16>
    %cst = arith.constant dense<0.000000e+00> : vector<48x128xf32>
    %3 = tpu.matmul %2, %1, %cst {dimension_numbers = #tpu.dot_dimension_numbers<[1], [0], [0], [1], [0, 0, 1, 1], [], []>} : vector<48x8xbf16>, vector<8x128xbf16>, vector<48x128xf32> -> vector<48x128xf32>
    %4 = tpu.iota {dimensions = array<i32: 1>} : vector<8x128xi32>
    %5 = vector.extract_strided_slice %3 {offsets = [0, 0], sizes = [8, 128], strides = [1, 1]} : vector<48x128xf32> to vector<8x128xf32>
    %c1_i32 = arith.constant 1 : i32
    %6 = tpu.dynamic_rotate %5 by %c1_i32 dim 1 : vector<8x128xf32>, i32 -> vector<8x128xf32>
    %c1_i32_4 = arith.constant 1 : i32
    %7 = vector.broadcast %c1_i32_4 : i32 to vector<8x128xi32>
    %8 = arith.cmpi sge, %4, %7 : vector<8x128xi32>
    %cst_5 = arith.constant 0.000000e+00 : f32
    %9 = vector.broadcast %cst_5 : f32 to vector<8x128xf32>
    %10 = arith.select %8, %6, %9 : vector<8x128xi1>, vector<8x128xf32>
    %11 = vector.extract_strided_slice %3 {offsets = [8, 0], sizes = [8, 128], strides = [1, 1]} : vector<48x128xf32> to vector<8x128xf32>
    %12 = arith.addf %10, %11 : vector<8x128xf32>
    %13 = vector.extract_strided_slice %3 {offsets = [16, 0], sizes = [8, 128], strides = [1, 1]} : vector<48x128xf32> to vector<8x128xf32>
    %c127_i32 = arith.constant 127 : i32
    %14 = tpu.dynamic_rotate %13 by %c127_i32 dim 1 : vector<8x128xf32>, i32 -> vector<8x128xf32>
    %c127_i32_6 = arith.constant 127 : i32
    %15 = vector.broadcast %c127_i32_6 : i32 to vector<8x128xi32>
    %16 = arith.cmpi slt, %4, %15 : vector<8x128xi32>
    %cst_7 = arith.constant 0.000000e+00 : f32
    %17 = vector.broadcast %cst_7 : f32 to vector<8x128xf32>
    %18 = arith.select %16, %14, %17 : vector<8x128xi1>, vector<8x128xf32>
    %19 = arith.addf %12, %18 : vector<8x128xf32>
    %c0_8 = arith.constant 0 : index
    %c0_9 = arith.constant 0 : index
    %20 = vector.load %arg3[%c0_8, %c0_9] : memref<8x1xf32, #tpu.memory_space<vmem>>, vector<8x1xf32>
    %21 = vector.broadcast %20 : vector<8x1xf32> to vector<8x128xf32>
    %22 = arith.addf %19, %21 : vector<8x128xf32>
    %cst_10 = arith.constant 3.000000e+00 : f32
    %23 = vector.broadcast %cst_10 : f32 to vector<8x128xf32>
    %24 = arith.addf %22, %23 : vector<8x128xf32>
    %cst_11 = arith.constant 0.000000e+00 : f32
    %cst_12 = arith.constant 6.000000e+00 : f32
    %25 = vector.broadcast %cst_11 : f32 to vector<8x128xf32>
    %26 = arith.maximumf %25, %24 : vector<8x128xf32>
    %27 = vector.broadcast %cst_12 : f32 to vector<8x128xf32>
    %28 = arith.minimumf %27, %26 : vector<8x128xf32>
    %29 = arith.mulf %22, %28 : vector<8x128xf32>
    %cst_13 = arith.constant 0.166666672 : f32
    %30 = vector.broadcast %cst_13 : f32 to vector<8x128xf32>
    %31 = arith.mulf %29, %30 : vector<8x128xf32>
    %32 = vector.extract_strided_slice %3 {offsets = [24, 0], sizes = [8, 128], strides = [1, 1]} : vector<48x128xf32> to vector<8x128xf32>
    %c2_i32 = arith.constant 2 : i32
    %33 = tpu.dynamic_rotate %32 by %c2_i32 dim 1 : vector<8x128xf32>, i32 -> vector<8x128xf32>
    %c2_i32_14 = arith.constant 2 : i32
    %34 = vector.broadcast %c2_i32_14 : i32 to vector<8x128xi32>
    %35 = arith.cmpi sge, %4, %34 : vector<8x128xi32>
    %cst_15 = arith.constant 0.000000e+00 : f32
    %36 = vector.broadcast %cst_15 : f32 to vector<8x128xf32>
    %37 = arith.select %35, %33, %36 : vector<8x128xi1>, vector<8x128xf32>
    %38 = vector.extract_strided_slice %3 {offsets = [32, 0], sizes = [8, 128], strides = [1, 1]} : vector<48x128xf32> to vector<8x128xf32>
    %39 = arith.addf %37, %38 : vector<8x128xf32>
    %40 = vector.extract_strided_slice %3 {offsets = [40, 0], sizes = [8, 128], strides = [1, 1]} : vector<48x128xf32> to vector<8x128xf32>
    %c126_i32 = arith.constant 126 : i32
    %41 = tpu.dynamic_rotate %40 by %c126_i32 dim 1 : vector<8x128xf32>, i32 -> vector<8x128xf32>
    %c126_i32_16 = arith.constant 126 : i32
    %42 = vector.broadcast %c126_i32_16 : i32 to vector<8x128xi32>
    %43 = arith.cmpi slt, %4, %42 : vector<8x128xi32>
    %cst_17 = arith.constant 0.000000e+00 : f32
    %44 = vector.broadcast %cst_17 : f32 to vector<8x128xf32>
    %45 = arith.select %43, %41, %44 : vector<8x128xi1>, vector<8x128xf32>
    %46 = arith.addf %39, %45 : vector<8x128xf32>
    %c0_18 = arith.constant 0 : index
    %c0_19 = arith.constant 0 : index
    %47 = vector.load %arg4[%c0_18, %c0_19] : memref<8x1xf32, #tpu.memory_space<vmem>>, vector<8x1xf32>
    %48 = vector.broadcast %47 : vector<8x1xf32> to vector<8x128xf32>
    %49 = arith.addf %46, %48 : vector<8x128xf32>
    %cst_20 = arith.constant 3.000000e+00 : f32
    %50 = vector.broadcast %cst_20 : f32 to vector<8x128xf32>
    %51 = arith.addf %49, %50 : vector<8x128xf32>
    %cst_21 = arith.constant 0.000000e+00 : f32
    %cst_22 = arith.constant 6.000000e+00 : f32
    %52 = vector.broadcast %cst_21 : f32 to vector<8x128xf32>
    %53 = arith.maximumf %52, %51 : vector<8x128xf32>
    %54 = vector.broadcast %cst_22 : f32 to vector<8x128xf32>
    %55 = arith.minimumf %54, %53 : vector<8x128xf32>
    %56 = arith.mulf %49, %55 : vector<8x128xf32>
    %cst_23 = arith.constant 0.166666672 : f32
    %57 = vector.broadcast %cst_23 : f32 to vector<8x128xf32>
    %58 = arith.mulf %56, %57 : vector<8x128xf32>
    %59 = arith.addf %31, %58 : vector<8x128xf32>
    %cst_24 = arith.constant dense<0.000000e+00> : vector<8xf32>
    %60 = vector.multi_reduction <add>, %59, %cst_24 [1] : vector<8x128xf32> to vector<8xf32>
    %61 = vector.shape_cast %60 : vector<8xf32> to vector<8x1xf32>
    %cst_25 = arith.constant 1.280000e+02 : f32
    %62 = vector.broadcast %cst_25 : f32 to vector<8x1xf32>
    %63 = arith.divf %61, %62 : vector<8x1xf32>
    %c0_26 = arith.constant 0 : index
    %c0_27 = arith.constant 0 : index
    %64 = vector.load %arg5[%c0_26, %c0_27] : memref<8x8xf32, #tpu.memory_space<vmem>>, vector<8x8xf32>
    %cst_28 = arith.constant dense<0.000000e+00> : vector<8x1xf32>
    %65 = tpu.matmul %64, %63, %cst_28 {dimension_numbers = #tpu.dot_dimension_numbers<[1], [0], [0], [1], [0, 0, 1, 1], [], []>} : vector<8x8xf32>, vector<8x1xf32>, vector<8x1xf32> -> vector<8x1xf32>
    %c0_29 = arith.constant 0 : index
    %c0_30 = arith.constant 0 : index
    %66 = vector.load %arg6[%c0_29, %c0_30] : memref<8x1xf32, #tpu.memory_space<vmem>>, vector<8x1xf32>
    %67 = arith.addf %65, %66 : vector<8x1xf32>
    %cst_31 = arith.constant 3.000000e+00 : f32
    %68 = vector.broadcast %cst_31 : f32 to vector<8x1xf32>
    %69 = arith.addf %67, %68 : vector<8x1xf32>
    %cst_32 = arith.constant 0.000000e+00 : f32
    %cst_33 = arith.constant 6.000000e+00 : f32
    %70 = vector.broadcast %cst_32 : f32 to vector<8x1xf32>
    %71 = arith.maximumf %70, %69 : vector<8x1xf32>
    %72 = vector.broadcast %cst_33 : f32 to vector<8x1xf32>
    %73 = arith.minimumf %72, %71 : vector<8x1xf32>
    %74 = arith.mulf %67, %73 : vector<8x1xf32>
    %cst_34 = arith.constant 0.166666672 : f32
    %75 = vector.broadcast %cst_34 : f32 to vector<8x1xf32>
    %76 = arith.mulf %74, %75 : vector<8x1xf32>
    %c0_35 = arith.constant 0 : index
    %c0_36 = arith.constant 0 : index
    %77 = vector.load %arg7[%c0_35, %c0_36] : memref<8x8xf32, #tpu.memory_space<vmem>>, vector<8x8xf32>
    %cst_37 = arith.constant dense<0.000000e+00> : vector<8x1xf32>
    %78 = tpu.matmul %77, %76, %cst_37 {dimension_numbers = #tpu.dot_dimension_numbers<[1], [0], [0], [1], [0, 0, 1, 1], [], []>} : vector<8x8xf32>, vector<8x1xf32>, vector<8x1xf32> -> vector<8x1xf32>
    %cst_38 = arith.constant 0.000000e+00 : f32
    %79 = vector.broadcast %cst_38 : f32 to vector<8x1xf32>
    %80 = arith.subf %79, %78 : vector<8x1xf32>
    %81 = math.exp %80 : vector<8x1xf32>
    %cst_39 = arith.constant 1.000000e+00 : f32
    %82 = vector.broadcast %cst_39 : f32 to vector<8x1xf32>
    %83 = arith.addf %82, %81 : vector<8x1xf32>
    %84 = tpu.reciprocal %83 {approx = true} : vector<8x1xf32> -> vector<8x1xf32>
    %85 = arith.subf %31, %58 : vector<8x128xf32>
    %86 = vector.broadcast %84 : vector<8x1xf32> to vector<8x128xf32>
    %87 = arith.mulf %86, %85 : vector<8x128xf32>
    %88 = arith.addf %58, %87 : vector<8x128xf32>
    %c0_40 = arith.constant 0 : index
    %c0_41 = arith.constant 0 : index
    %c0_42 = arith.constant 0 : index
    %89 = vector.load %arg8[%c0_40, %c0_41, %c0_42] : memref<1x8x128xf32, #tpu.memory_space<vmem>>, vector<1x8x128xf32>
    %90 = vector.shape_cast %89 : vector<1x8x128xf32> to vector<8x128xf32>
    %91 = vector.shape_cast %88 : vector<8x128xf32> to vector<1x8x128xf32>
    tpu.vector_store %arg8[%c0_40, %c0_41, %c0_42], %91 {strides = array<i32>} : memref<1x8x128xf32, #tpu.memory_space<vmem>>, vector<1x8x128xf32>,
    return
  }
  func.func @transform_0(%arg0: i32) -> (i32, i32, i32) {
    %c0_i32 = arith.constant 0 : i32
    %c0_i32_0 = arith.constant 0 : i32
    %c0_i32_1 = arith.constant 0 : i32
    return %arg0, %c0_i32, %c0_i32_0 : i32, i32, i32
  }
  func.func @transform_1(%arg0: i32) -> (i32, i32) {
    %c0_i32 = arith.constant 0 : i32
    %c0_i32_0 = arith.constant 0 : i32
    %c0_i32_1 = arith.constant 0 : i32
    return %c0_i32, %c0_i32_0 : i32, i32
  }
  func.func @transform_2(%arg0: i32) -> (i32, i32) {
    %c0_i32 = arith.constant 0 : i32
    %c0_i32_0 = arith.constant 0 : i32
    %c0_i32_1 = arith.constant 0 : i32
    return %c0_i32, %c0_i32_0 : i32, i32
  }
  func.func @transform_3(%arg0: i32) -> (i32, i32) {
    %c0_i32 = arith.constant 0 : i32
    %c0_i32_0 = arith.constant 0 : i32
    %c0_i32_1 = arith.constant 0 : i32
    return %c0_i32, %c0_i32_0 : i32, i32
  }
  func.func @transform_4(%arg0: i32) -> (i32, i32) {
    %c0_i32 = arith.constant 0 : i32
    %c0_i32_0 = arith.constant 0 : i32
    %c0_i32_1 = arith.constant 0 : i32
    return %c0_i32, %c0_i32_0 : i32, i32
  }
  func.func @transform_5(%arg0: i32) -> (i32, i32) {
    %c0_i32 = arith.constant 0 : i32
    %c0_i32_0 = arith.constant 0 : i32
    %c0_i32_1 = arith.constant 0 : i32
    return %c0_i32, %c0_i32_0 : i32, i32
  }
  func.func @transform_6(%arg0: i32) -> (i32, i32) {
    %c0_i32 = arith.constant 0 : i32
    %c0_i32_0 = arith.constant 0 : i32
    %c0_i32_1 = arith.constant 0 : i32
    return %c0_i32, %c0_i32_0 : i32, i32
  }
  func.func @transform_7(%arg0: i32) -> (i32, i32, i32) {
    %c0_i32 = arith.constant 0 : i32
    %c0_i32_0 = arith.constant 0 : i32
    %c0_i32_1 = arith.constant 0 : i32
    return %arg0, %c0_i32, %c0_i32_0 : i32, i32, i32
  }
}

</mosaic_0001>

<llo_original>
// kernel: tpu_custom_call.1
$region0: #{tpu_custom_call.1}
  #allocation0 [shape = 'u32[]', space=smem, size = 0x4, offset = 0x4, fixed_abs, tag = 'smem constant byte address 0x4 - core index']
  #allocation1 [shape = 'u32[144,128]{1,0:T(1,128)}', space=vmem, size = 0x12000, scoped, tag = 'internal scratch']
  %s0 = inlined_call_operand.vmem [shape: bf16[2,8,128], index: 0, kind: input, shape index: {}]
  %s1 = inlined_call_operand.vmem [shape: bf16[48,8], index: 1, kind: input, shape index: {}]
  %s2 = inlined_call_operand.vmem [shape: f32[8,1], index: 2, kind: input, shape index: {}]
  %s3 = inlined_call_operand.vmem [shape: f32[8,1], index: 3, kind: input, shape index: {}]
  %s4 = inlined_call_operand.vmem [shape: f32[8,8], index: 4, kind: input, shape index: {}]
  %s5 = inlined_call_operand.vmem [shape: f32[8,1], index: 5, kind: input, shape index: {}]
  %s6 = inlined_call_operand.vmem [shape: f32[8,8], index: 6, kind: input, shape index: {}]
  %s7 = inlined_call_operand.hbm [shape: f32[2,8,128], index: 7, kind: output, shape index: {}]
  %s8 = sld [smem:[#allocation0]]
  $region61: #{tpu_custom_call.1} parent=0
    _
  %s10 = ssub.s32 1, %s8
  %s11 = scalar_select 0, %s10, %s8
  $region1: #{tpu_custom_call.1} parent=0
    #allocation2 [shape = 'u8[8192]{0}', space=vmem, size = 0x2000, scoped, tag = 'output window, operand 0']
    #allocation3 [shape = 's32[2]{0}', space=sflag, size = 0x8, scoped, tag = 'scoped memory for tpu_custom_call.1']
    %12 = vsyncpa [#allocation3], 0
    %s13 = scalar_lea.sflag [#allocation3], 1
    %14 = vsyncpa %s13, 0
    loop: start=0, step=1, limit=4
    $region2: #{tpu_custom_call.1} parent=1 // loop_pre_header
      _
    $region3: #{tpu_custom_call.1} parent=1 // loop_header
      %s16 = sphi 0, %s20
      %p17 = scmp.ge.s32.totalorder %s16, 4
      %s26 = sphi 0, %s28
      %s29 = sphi 0, %s26
      %s30 = sphi 0, %s29
      %s46 = sphi 0, %s30
      %s50 = sphi 0, %s50
      %s52 = sphi 0, %s50
      %s53 = sphi 0, %s52
      %s67 = sphi 0, %s53
      %s71 = sphi 0, %s71
      %s73 = sphi 0, %s71
      %s74 = sphi 0, %s73
      %s88 = sphi 0, %s74
      %s92 = sphi 0, %s92
      %s94 = sphi 0, %s92
      %s95 = sphi 0, %s94
      %s109 = sphi 0, %s95
      %s113 = sphi 0, %s113
      %s115 = sphi 0, %s113
      %s116 = sphi 0, %s115
      %s130 = sphi 0, %s116
      %s134 = sphi 0, %s134
      %s136 = sphi 0, %s134
      %s137 = sphi 0, %s136
      %s151 = sphi 0, %s137
      %s155 = sphi 0, %s155
      %s157 = sphi 0, %s155
      %s158 = sphi 0, %s157
      %s172 = sphi 0, %s158
      %s178 = sphi 0, %s180
      %s181 = sphi 0, %s178
      %s182 = sphi 0, %s181
      %s198 = sphi 0, %s182
    $region4: #{tpu_custom_call.1} parent=1 // loop_header_branch
      %19 = sbr.rel (%p17) target = $region8
    $region5: #{tpu_custom_call.1} parent=1 // loop_body
      %s21 = ssub.s32 %s16, 1
      %s22 = ssub.s32 %s16, 2
      %s23 = sadd.s32 %s16, 1
      %s24 = ssub.s32 %s16, %s23
      %p25 = scmp.eq.s32.totalorder %s24, 0
      %s27 = sadd.s32 %s26, 1
      %s28 = scalar_select %p25, %s26, %s27
      %p31 = pneg %p25
      %p32 = scmp.eq.s32.totalorder %s16, 1
      %p33 = por %p31, %p32
      %p34 = scmp.ne.s32.totalorder %s26, %s29
      %p35 = scmp.eq.s32.totalorder %s16, 0
      %p36 = por %p34, %p35
      %p37 = scmp.ne.s32.totalorder %s26, %s29
      %p38 = scmp.eq.s32.totalorder %s21, 1
      %p39 = por %p37, %p38
      %p40 = scmp.ne.s32.totalorder %s29, %s30
      %p41 = scmp.eq.s32.totalorder %s21, 0
      %p42 = por %p40, %p41
      %p43 = scmp.ne.s32.totalorder %s29, %s30
      %p44 = scmp.eq.s32.totalorder %s22, 1
      %p45 = por %p43, %p44
      %p47 = scmp.ne.s32.totalorder %s30, %s46
      %p48 = scmp.eq.s32.totalorder %s22, 0
      %p49 = por %p47, %p48
      %s51 = sadd.s32 %s50, 1
      %p54 = scmp.eq.s32.totalorder %s16, 1
      %p55 = scmp.ne.s32.totalorder %s50, %s52
      %p56 = scmp.eq.s32.totalorder %s16, 0
      %p57 = por %p55, %p56
      %p58 = scmp.ne.s32.totalorder %s50, %s52
      %p59 = scmp.eq.s32.totalorder %s21, 1
      %p60 = por %p58, %p59
      %p61 = scmp.ne.s32.totalorder %s52, %s53
      %p62 = scmp.eq.s32.totalorder %s21, 0
      %p63 = por %p61, %p62
      %p64 = scmp.ne.s32.totalorder %s52, %s53
      %p65 = scmp.eq.s32.totalorder %s22, 1
      %p66 = por %p64, %p65
      %p68 = scmp.ne.s32.totalorder %s53, %s67
      %p69 = scmp.eq.s32.totalorder %s22, 0
      %p70 = por %p68, %p69
      %s72 = sadd.s32 %s71, 1
      %p75 = scmp.eq.s32.totalorder %s16, 1
      %p76 = scmp.ne.s32.totalorder %s71, %s73
      %p77 = scmp.eq.s32.totalorder %s16, 0
      %p78 = por %p76, %p77
      %p79 = scmp.ne.s32.totalorder %s71, %s73
      %p80 = scmp.eq.s32.totalorder %s21, 1
      %p81 = por %p79, %p80
      %p82 = scmp.ne.s32.totalorder %s73, %s74
      %p83 = scmp.eq.s32.totalorder %s21, 0
      %p84 = por %p82, %p83
      %p85 = scmp.ne.s32.totalorder %s73, %s74
      %p86 = scmp.eq.s32.totalorder %s22, 1
      %p87 = por %p85, %p86
      %p89 = scmp.ne.s32.totalorder %s74, %s88
      %p90 = scmp.eq.s32.totalorder %s22, 0
      %p91 = por %p89, %p90
      %s93 = sadd.s32 %s92, 1
      %p96 = scmp.eq.s32.totalorder %s16, 1
      %p97 = scmp.ne.s32.totalorder %s92, %s94
      %p98 = scmp.eq.s32.totalorder %s16, 0
      %p99 = por %p97, %p98
      %p100 = scmp.ne.s32.totalorder %s92, %s94
      %p101 = scmp.eq.s32.totalorder %s21, 1
      %p102 = por %p100, %p101
      %p103 = scmp.ne.s32.totalorder %s94, %s95
      %p104 = scmp.eq.s32.totalorder %s21, 0
      %p105 = por %p103, %p104
      %p106 = scmp.ne.s32.totalorder %s94, %s95
      %p107 = scmp.eq.s32.totalorder %s22, 1
      %p108 = por %p106, %p107
      %p110 = scmp.ne.s32.totalorder %s95, %s109
      %p111 = scmp.eq.s32.totalorder %s22, 0
      %p112 = por %p110, %p111
      %s114 = sadd.s32 %s113, 1
      %p117 = scmp.eq.s32.totalorder %s16, 1
      %p118 = scmp.ne.s32.totalorder %s113, %s115
      %p119 = scmp.eq.s32.totalorder %s16, 0
      %p120 = por %p118, %p119
      %p121 = scmp.ne.s32.totalorder %s113, %s115
      %p122 = scmp.eq.s32.totalorder %s21, 1
      %p123 = por %p121, %p122
      %p124 = scmp.ne.s32.totalorder %s115, %s116
      %p125 = scmp.eq.s32.totalorder %s21, 0
      %p126 = por %p124, %p125
      %p127 = scmp.ne.s32.totalorder %s115, %s116
      %p128 = scmp.eq.s32.totalorder %s22, 1
      %p129 = por %p127, %p128
      %p131 = scmp.ne.s32.totalorder %s116, %s130
      %p132 = scmp.eq.s32.totalorder %s22, 0
      %p133 = por %p131, %p132
      %s135 = sadd.s32 %s134, 1
      %p138 = scmp.eq.s32.totalorder %s16, 1
      %p139 = scmp.ne.s32.totalorder %s134, %s136
      %p140 = scmp.eq.s32.totalorder %s16, 0
      %p141 = por %p139, %p140
      %p142 = scmp.ne.s32.totalorder %s134, %s136
      %p143 = scmp.eq.s32.totalorder %s21, 1
      %p144 = por %p142, %p143
      %p145 = scmp.ne.s32.totalorder %s136, %s137
      %p146 = scmp.eq.s32.totalorder %s21, 0
      %p147 = por %p145, %p146
      %p148 = scmp.ne.s32.totalorder %s136, %s137
      %p149 = scmp.eq.s32.totalorder %s22, 1
      %p150 = por %p148, %p149
      %p152 = scmp.ne.s32.totalorder %s137, %s151
      %p153 = scmp.eq.s32.totalorder %s22, 0
      %p154 = por %p152, %p153
      %s156 = sadd.s32 %s155, 1
      %p159 = scmp.eq.s32.totalorder %s16, 1
      %p160 = scmp.ne.s32.totalorder %s155, %s157
      %p161 = scmp.eq.s32.totalorder %s16, 0
      %p162 = por %p160, %p161
      %p163 = scmp.ne.s32.totalorder %s155, %s157
      %p164 = scmp.eq.s32.totalorder %s21, 1
      %p165 = por %p163, %p164
      %p166 = scmp.ne.s32.totalorder %s157, %s158
      %p167 = scmp.eq.s32.totalorder %s21, 0
      %p168 = por %p166, %p167
      %p169 = scmp.ne.s32.totalorder %s157, %s158
      %p170 = scmp.eq.s32.totalorder %s22, 1
      %p171 = por %p169, %p170
      %p173 = scmp.ne.s32.totalorder %s158, %s172
      %p174 = scmp.eq.s32.totalorder %s22, 0
      %p175 = por %p173, %p174
      %s176 = ssub.s32 %s16, %s23
      %p177 = scmp.eq.s32.totalorder %s176, 0
      %s179 = sadd.s32 %s178, 1
      %s180 = scalar_select %p177, %s178, %s179
      %p183 = pneg %p177
      %p184 = scmp.eq.s32.totalorder %s16, 1
      %p185 = por %p183, %p184
      %p186 = scmp.ne.s32.totalorder %s178, %s181
      %p187 = scmp.eq.s32.totalorder %s16, 0
      %p188 = por %p186, %p187
      %p189 = scmp.ne.s32.totalorder %s178, %s181
      %p190 = scmp.eq.s32.totalorder %s21, 1
      %p191 = por %p189, %p190
      %p192 = scmp.ne.s32.totalorder %s181, %s182
      %p193 = scmp.eq.s32.totalorder %s21, 0
      %p194 = por %p192, %p193
      %p195 = scmp.ne.s32.totalorder %s181, %s182
      %p196 = scmp.eq.s32.totalorder %s22, 1
      %p197 = por %p195, %p196
      %p199 = scmp.ne.s32.totalorder %s182, %s198
      %p200 = scmp.eq.s32.totalorder %s22, 0
      %p201 = por %p199, %p200
      %p202 = scmp.le.s32.totalorder 1, %s16
      %p203 = scmp.lt.s32.totalorder %s16, 3
      %p204 = pnand %p202, %p203
      %p205 = pneg %p204
      // Predicated region
      $region9: #{tpu_custom_call.1} parent=5 // pred_check
        _
      $region10: #{tpu_custom_call.1} parent=5 // pred_check_branch
        %207 = sbr.rel (%p204) target = $region12
      $region11: #{tpu_custom_call.1} parent=5 // pred_region
        %s208 = ssub.s32 %s16, 1
        // Predicated region
        $region13: #{tpu_custom_call.1} parent=11 // pred_check
          %p209 = pneg %p63
        $region14: #{tpu_custom_call.1} parent=11 // pred_check_branch
          %211 = sbr.rel (%p209) target = $region16
        $region15: #{tpu_custom_call.1} parent=11 // pred_region
          _
        $region16: #{tpu_custom_call.1} parent=11 // pred_fallthru
          _
        // Predicated region
        $region17: #{tpu_custom_call.1} parent=11 // pred_check
          %p212 = pneg %p84
        $region18: #{tpu_custom_call.1} parent=11 // pred_check_branch
          %214 = sbr.rel (%p212) target = $region20
        $region19: #{tpu_custom_call.1} parent=11 // pred_region
          _
        $region20: #{tpu_custom_call.1} parent=11 // pred_fallthru
          _
        // Predicated region
        $region21: #{tpu_custom_call.1} parent=11 // pred_check
          %p215 = pneg %p105
        $region22: #{tpu_custom_call.1} parent=11 // pred_check_branch
          %217 = sbr.rel (%p215) target = $region24
        $region23: #{tpu_custom_call.1} parent=11 // pred_region
          _
        $region24: #{tpu_custom_call.1} parent=11 // pred_fallthru
          _
        // Predicated region
        $region25: #{tpu_custom_call.1} parent=11 // pred_check
          %p218 = pneg %p126
        $region26: #{tpu_custom_call.1} parent=11 // pred_check_branch
          %220 = sbr.rel (%p218) target = $region28
        $region27: #{tpu_custom_call.1} parent=11 // pred_region
          _
        $region28: #{tpu_custom_call.1} parent=11 // pred_fallthru
          _
        // Predicated region
        $region29: #{tpu_custom_call.1} parent=11 // pred_check
          %p221 = pneg %p147
        $region30: #{tpu_custom_call.1} parent=11 // pred_check_branch
          %223 = sbr.rel (%p221) target = $region32
        $region31: #{tpu_custom_call.1} parent=11 // pred_region
          _
        $region32: #{tpu_custom_call.1} parent=11 // pred_fallthru
          _
        // Predicated region
        $region33: #{tpu_custom_call.1} parent=11 // pred_check
          %p224 = pneg %p168
        $region34: #{tpu_custom_call.1} parent=11 // pred_check_branch
          %226 = sbr.rel (%p224) target = $region36
        $region35: #{tpu_custom_call.1} parent=11 // pred_region
          _
        $region36: #{tpu_custom_call.1} parent=11 // pred_fallthru
          _
      $region12: #{tpu_custom_call.1} parent=5 // pred_fallthru
        _
      %p227 = scmp.lt.s32.totalorder %s16, 2
      // Predicated region
      $region37: #{tpu_custom_call.1} parent=5 // pred_check
        %p228 = pneg %p227
      $region38: #{tpu_custom_call.1} parent=5 // pred_check_branch
        %230 = sbr.rel (%p228) target = $region40
      $region39: #{tpu_custom_call.1} parent=5 // pred_region
        // Predicated region
        $region41: #{tpu_custom_call.1} parent=39 // pred_check
          %p231 = pneg %p36
        $region42: #{tpu_custom_call.1} parent=39 // pred_check_branch
          %233 = sbr.rel (%p231) target = $region44
        $region43: #{tpu_custom_call.1} parent=39 // pred_region
          %p234 = scmp.lt.s32.totalorder %s16, 1
          %s235 = scalar_select %p234, %s16, 1
          %s236 = smul.addr %s235, 4
          %s237 = scalar_lea.vmem %s0, %s236
        $region44: #{tpu_custom_call.1} parent=39 // pred_fallthru
          _
      $region40: #{tpu_custom_call.1} parent=5 // pred_fallthru
        _
      %p238 = scmp.le.s32.totalorder 1, %s16
      %p239 = scmp.lt.s32.totalorder %s16, 3
      %p240 = pnand %p238, %p239
      %p241 = pneg %p240
      // Predicated region
      $region45: #{tpu_custom_call.1} parent=5 // pred_check
        _
      $region46: #{tpu_custom_call.1} parent=5 // pred_check_branch
        %243 = sbr.rel (%p240) target = $region48
      $region47: #{tpu_custom_call.1} parent=5 // pred_region
        %s244 = ssub.s32 %s16, 1
        %p245 = scmp.lt.s32.totalorder %s21, 1
        %s246 = scalar_select %p245, %s21, 1
        %s247 = smul.addr %s246, 4
        %s248 = scalar_lea.vmem %s0, %s247
        %p249 = pneg %p42
        %p250 = pneg %p39
        %p251 = pneg %p63
        %p252 = pneg %p60
        %p253 = pneg %p84
        %p254 = pneg %p81
        %p255 = pneg %p105
        %p256 = pneg %p102
        %p257 = pneg %p126
        %p258 = pneg %p123
        %p259 = pneg %p147
        %p260 = pneg %p144
        %p261 = pneg %p168
        %p262 = pneg %p165
        %p263 = pneg %p194
        %p264 = pneg %p191
        %s265 = sand.u32 %s181, 1
        %s266 = scalar_lea.sflag [#allocation3], %s265
        %s267 = sand.u32 %s181, 1
        %s268 = smul.addr %s267, 8
        %s269 = scalar_lea.vmem [#allocation2], %s268
        %p270 = scmp.lt.s32.totalorder %s21, 1
        %s271 = scalar_select %p270, %s21, 1
        %s272 = smul.addr %s271, 4
        %s273 = scalar_lea.vmem %s0, %s272
        %v275 = vld [vmem:[%s273] sm:$0xf]
        %v276 = vld [vmem:[%s1] sm:$0xf]
        %v277 = vld [vmem:[%s1 + $0x4] sm:$0xf]
        %v278 = vld [vmem:[%s1 + $0x8] sm:$0xf]
        %v279 = vld [vmem:[%s1 + $0xc] sm:$0xf]
        %v280 = vld [vmem:[%s1 + $0x10] sm:$0xf]
        %v281 = vld [vmem:[%s1 + $0x14] sm:$0xf]
        %v288 = vunpack.c.l.b16 %v276
        %v289 = vunpack.c.l.b16 %v277
        %v290 = vunpack.c.l.b16 %v278
        %v291 = vunpack.c.l.b16 %v279
        %v292 = vunpack.c.l.b16 %v280
        %v293 = vunpack.c.l.b16 %v281
        %v294 = vpack.c.b16 %v289, %v288
        %v295 = vpack.c.b16 %v291, %v290
        %v296 = vpack.c.b16 %v293, %v292
        %vm297 = vcmask 64512
        %v299 = vsel %vm297, %v294, 0
        %v302 = vsel %vm297, %v295, 0
        %v305 = vsel %vm297, %v296, 0
        %vm307 = vcmask 1043456
        %v309 = vsel %vm307, %v275, 0
        %311 = vmatprep.subr.bf16.mxu0 0
        %312 = vmatpush1.bf16.msra.mxu0 %v309
        %313 = vmatprep.subr.bf16.mxu0 0
        %314 = vmatpush1.bf16.msra.mxu0 0
        %315 = vmatprep.subr.bf16.mxu0 0
        %316 = vmatpush1.bf16.msra.mxu0 0
        %317 = vmatprep.subr.bf16.mxu0 0
        %318 = vmatpush1.bf16.msra.mxu0 0
        %319 = vmatprep.subr.bf16.mxu0 0
        %320 = vmatpush1.bf16.msra.mxu0 0
        %321 = vmatprep.subr.bf16.mxu0 0
        %322 = vmatpush1.bf16.msra.mxu0 0
        %323 = vmatprep.subr.bf16.mxu0 0
        %324 = vmatpush1.bf16.msra.mxu0 0
        %325 = vmatprep.subr.bf16.mxu0 0
        %326 = vmatpush1.bf16.msra.mxu0 0
        %327 = vmatprep.subr.bf16.mxu0 0
        %328 = vmatpush1.bf16.msra.mxu0 0
        %329 = vmatprep.subr.bf16.mxu0 0
        %330 = vmatpush1.bf16.msra.mxu0 0
        %331 = vmatprep.subr.bf16.mxu0 0
        %332 = vmatpush1.bf16.msra.mxu0 0
        %333 = vmatprep.subr.bf16.mxu0 0
        %334 = vmatpush1.bf16.msra.mxu0 0
        %335 = vmatprep.subr.bf16.mxu0 0
        %336 = vmatpush1.bf16.msra.mxu0 0
        %337 = vmatprep.subr.bf16.mxu0 0
        %338 = vmatpush1.bf16.msra.mxu0 0
        %339 = vmatprep.subr.bf16.mxu0 0
        %340 = vmatpush1.bf16.msra.mxu0 0
        %341 = vmatprep.subr.bf16.mxu0 0
        %342 = vmatpush1.bf16.msra.mxu0 0
        %343 = vmatprep.mubr.bf16.mxu0 0
        %344 = vmatmul.mubr.bf16.gmra.mrb[0].mxu0 %v299
        %v345 = vpop.f32.mrb[0].mxu0
        %v346 = vadd.f32 0.0, %v345
        %v347 = vpop.f32.mrb[0].mxu0
        %v348 = vpop.f32.mrb[0].mxu0
        %v349 = vadd.f32 0.0, %v348
        %v350 = vpop.f32.mrb[0].mxu0
        %351 = vmatprep.mubr.bf16.mxu0 0
        %352 = vmatmul.mubr.bf16.gmra.mrb[0].mxu0 %v302
        %v353 = vpop.f32.mrb[0].mxu0
        %v354 = vadd.f32 0.0, %v353
        %v355 = vpop.f32.mrb[0].mxu0
        %v356 = vpop.f32.mrb[0].mxu0
        %v357 = vadd.f32 0.0, %v356
        %v358 = vpop.f32.mrb[0].mxu0
        %359 = vmatprep.mubr.bf16.mxu0 0
        %360 = vmatmul.mubr.bf16.gmra.mrb[0].mxu0 %v305
        %v361 = vpop.f32.mrb[0].mxu0
        %v362 = vadd.f32 0.0, %v361
        %v363 = vpop.f32.mrb[0].mxu0
        %v364 = vpop.f32.mrb[0].mxu0
        %v365 = vadd.f32 0.0, %v364
        %v366 = vpop.f32.mrb[0].mxu0
        %367 = vdwg.mxu0
        %v368 = vlaneseq
        %v369 = vand.u32 %v368, 127
        %370 = vrot.lane.b32.xlu0 %v346, 1
        %v371 = vpop.permute.xlu0 %370
        %vm372 = vcmp.ge.s32.totalorder %v369, 1
        %v373 = vsel %vm372, %v371, 0.0
        %v374 = vadd.f32 %v373, %v349
        %375 = vrot.lane.b32.xlu0 %v354, 127
        %v376 = vpop.permute.xlu0 %375
        %vm377 = vcmp.lt.s32.totalorder %v369, 127
        %v378 = vsel %vm377, %v376, 0.0
        %v379 = vadd.f32 %v374, %v378
        %v380 = vld [vmem:[%s2] sm:$0xff]
        %382 = vset.pattern.permute.xlu0 0
        %383 = vperm.xlu0 %382, %v380
        %v384 = vpop.permute.xlu0 %383
        %v386 = vadd.f32 %v379, %v384
        %v387 = vadd.f32 %v386, 3.0
        %v388 = vmax.f32 %v387, 0.0
        %v389 = vmin.f32 %v388, 6.0
        %v390 = vmul.f32 %v386, %v389
        %v391 = vmul.f32 %v390, 0.16666667
        %392 = vrot.lane.b32.xlu0 %v357, 2
        %v393 = vpop.permute.xlu0 %392
        %vm394 = vcmp.ge.s32.totalorder %v369, 2
        %v395 = vsel %vm394, %v393, 0.0
        %v396 = vadd.f32 %v395, %v362
        %397 = vrot.lane.b32.xlu0 %v365, 126
        %v398 = vpop.permute.xlu0 %397
        %vm399 = vcmp.lt.s32.totalorder %v369, 126
        %v400 = vsel %vm399, %v398, 0.0
        %v401 = vadd.f32 %v396, %v400
        %v402 = vld [vmem:[%s3] sm:$0xff]
        %404 = vset.pattern.permute.xlu0 0
        %405 = vperm.xlu0 %404, %v402
        %v406 = vpop.permute.xlu0 %405
        %v408 = vadd.f32 %v401, %v406
        %v409 = vadd.f32 %v408, 3.0
        %v410 = vmax.f32 %v409, 0.0
        %v411 = vmin.f32 %v410, 6.0
        %v412 = vmul.f32 %v408, %v411
        %v413 = vmul.f32 %v412, 0.16666667
        %v414 = vadd.f32 %v391, %v413
        %415 = vadd.xlane.f32.xlu0 %v414
        %v416 = vpop.xlane.xlu0 %415
        %v417 = vrcp.pop 128.0
        %v418 = vmul.f32 %v416, %v417
        %v419 = vld [vmem:[%s4] sm:$0xff]
        %v420 = vld [vmem:[%s5] sm:$0xff]
        %v422 = vsel %vm297, %v419, 0
        %424 = vmatprep.subr.mxu0 0.0
        %425 = vmatpush1.msra.mxu0 %v418
        %426 = vmatprep.subr.mxu0 0.0
        %427 = vmatpush1.msra.mxu0 0.0
        %428 = vmatprep.subr.mxu0 0.0
        %429 = vmatpush1.msra.mxu0 0.0
        %430 = vmatprep.subr.mxu0 0.0
        %431 = vmatpush1.msra.mxu0 0.0
        %432 = vmatprep.subr.mxu0 0.0
        %433 = vmatpush1.msra.mxu0 0.0
        %434 = vmatprep.subr.mxu0 0.0
        %435 = vmatpush1.msra.mxu0 0.0
        %436 = vmatprep.subr.mxu0 0.0
        %437 = vmatpush1.msra.mxu0 0.0
        %438 = vmatprep.subr.mxu0 0.0
        %439 = vmatpush1.msra.mxu0 0.0
        %440 = vmatprep.subr.mxu0 0.0
        %441 = vmatpush1.msra.mxu0 0.0
        %442 = vmatprep.subr.mxu0 0.0
        %443 = vmatpush1.msra.mxu0 0.0
        %444 = vmatprep.subr.mxu0 0.0
        %445 = vmatpush1.msra.mxu0 0.0
        %446 = vmatprep.subr.mxu0 0.0
        %447 = vmatpush1.msra.mxu0 0.0
        %448 = vmatprep.subr.mxu0 0.0
        %449 = vmatpush1.msra.mxu0 0.0
        %450 = vmatprep.subr.mxu0 0.0
        %451 = vmatpush1.msra.mxu0 0.0
        %452 = vmatprep.subr.mxu0 0.0
        %453 = vmatpush1.msra.mxu0 0.0
        %454 = vmatprep.subr.mxu0 0.0
        %455 = vmatpush1.msra.mxu0 0.0
        %456 = vmatprep.subr.mxu0 0.0
        %457 = vmatpush1.msra.mxu0 0.0
        %458 = vmatprep.subr.mxu0 0.0
        %459 = vmatpush1.msra.mxu0 0.0
        %460 = vmatprep.subr.mxu0 0.0
        %461 = vmatpush1.msra.mxu0 0.0
        %462 = vmatprep.subr.mxu0 0.0
        %463 = vmatpush1.msra.mxu0 0.0
        %464 = vmatprep.subr.mxu0 0.0
        %465 = vmatpush1.msra.mxu0 0.0
        %466 = vmatprep.subr.mxu0 0.0
        %467 = vmatpush1.msra.mxu0 0.0
        %468 = vmatprep.subr.mxu0 0.0
        %469 = vmatpush1.msra.mxu0 0.0
        %470 = vmatprep.subr.mxu0 0.0
        %471 = vmatpush1.msra.mxu0 0.0
        %472 = vmatprep.subr.mxu0 0.0
        %473 = vmatpush1.msra.mxu0 0.0
        %474 = vmatprep.subr.mxu0 0.0
        %475 = vmatpush1.msra.mxu0 0.0
        %476 = vmatprep.subr.mxu0 0.0
        %477 = vmatpush1.msra.mxu0 0.0
        %478 = vmatprep.subr.mxu0 0.0
        %479 = vmatpush1.msra.mxu0 0.0
        %480 = vmatprep.subr.mxu0 0.0
        %481 = vmatpush1.msra.mxu0 0.0
        %482 = vmatprep.subr.mxu0 0.0
        %483 = vmatpush1.msra.mxu0 0.0
        %484 = vmatprep.subr.mxu0 0.0
        %485 = vmatpush1.msra.mxu0 0.0
        %486 = vmatprep.subr.mxu0 0.0
        %487 = vmatpush1.msra.mxu0 0.0
        %488 = vmatprep.mubr.f32.mxu0 0.0
        %489 = vmatmul.mubr.f32.gmra.mrb[0].mxu0 %v422
        %v490 = vpop.f32.mrb[0].mxu0
        %v491 = vadd.f32 %v420, %v490
        %v492 = vpop.f32.mrb[0].mxu0
        %493 = vdwg.mxu0
        %v494 = vadd.f32 %v491, 3.0
        %v495 = vmax.f32 %v494, 0.0
        %v496 = vmin.f32 %v495, 6.0
        %v497 = vmul.f32 %v491, %v496
        %v498 = vmul.f32 %v497, 0.16666667
        %v499 = vld [vmem:[%s6] sm:$0xff]
        %v501 = vsel %vm297, %v499, 0
        %503 = vmatprep.subr.mxu0 0.0
        %504 = vmatpush1.msra.mxu0 %v498
        %505 = vmatprep.subr.mxu0 0.0
        %506 = vmatpush1.msra.mxu0 0.0
        %507 = vmatprep.subr.mxu0 0.0
        %508 = vmatpush1.msra.mxu0 0.0
        %509 = vmatprep.subr.mxu0 0.0
        %510 = vmatpush1.msra.mxu0 0.0
        %511 = vmatprep.subr.mxu0 0.0
        %512 = vmatpush1.msra.mxu0 0.0
        %513 = vmatprep.subr.mxu0 0.0
        %514 = vmatpush1.msra.mxu0 0.0
        %515 = vmatprep.subr.mxu0 0.0
        %516 = vmatpush1.msra.mxu0 0.0
        %517 = vmatprep.subr.mxu0 0.0
        %518 = vmatpush1.msra.mxu0 0.0
        %519 = vmatprep.subr.mxu0 0.0
        %520 = vmatpush1.msra.mxu0 0.0
        %521 = vmatprep.subr.mxu0 0.0
        %522 = vmatpush1.msra.mxu0 0.0
        %523 = vmatprep.subr.mxu0 0.0
        %524 = vmatpush1.msra.mxu0 0.0
        %525 = vmatprep.subr.mxu0 0.0
        %526 = vmatpush1.msra.mxu0 0.0
        %527 = vmatprep.subr.mxu0 0.0
        %528 = vmatpush1.msra.mxu0 0.0
        %529 = vmatprep.subr.mxu0 0.0
        %530 = vmatpush1.msra.mxu0 0.0
        %531 = vmatprep.subr.mxu0 0.0
        %532 = vmatpush1.msra.mxu0 0.0
        %533 = vmatprep.subr.mxu0 0.0
        %534 = vmatpush1.msra.mxu0 0.0
        %535 = vmatprep.subr.mxu0 0.0
        %536 = vmatpush1.msra.mxu0 0.0
        %537 = vmatprep.subr.mxu0 0.0
        %538 = vmatpush1.msra.mxu0 0.0
        %539 = vmatprep.subr.mxu0 0.0
        %540 = vmatpush1.msra.mxu0 0.0
        %541 = vmatprep.subr.mxu0 0.0
        %542 = vmatpush1.msra.mxu0 0.0
        %543 = vmatprep.subr.mxu0 0.0
        %544 = vmatpush1.msra.mxu0 0.0
        %545 = vmatprep.subr.mxu0 0.0
        %546 = vmatpush1.msra.mxu0 0.0
        %547 = vmatprep.subr.mxu0 0.0
        %548 = vmatpush1.msra.mxu0 0.0
        %549 = vmatprep.subr.mxu0 0.0
        %550 = vmatpush1.msra.mxu0 0.0
        %551 = vmatprep.subr.mxu0 0.0
        %552 = vmatpush1.msra.mxu0 0.0
        %553 = vmatprep.subr.mxu0 0.0
        %554 = vmatpush1.msra.mxu0 0.0
        %555 = vmatprep.subr.mxu0 0.0
        %556 = vmatpush1.msra.mxu0 0.0
        %557 = vmatprep.subr.mxu0 0.0
        %558 = vmatpush1.msra.mxu0 0.0
        %559 = vmatprep.subr.mxu0 0.0
        %560 = vmatpush1.msra.mxu0 0.0
        %561 = vmatprep.subr.mxu0 0.0
        %562 = vmatpush1.msra.mxu0 0.0
        %563 = vmatprep.subr.mxu0 0.0
        %564 = vmatpush1.msra.mxu0 0.0
        %565 = vmatprep.subr.mxu0 0.0
        %566 = vmatpush1.msra.mxu0 0.0
        %567 = vmatprep.mubr.f32.mxu0 0.0
        %568 = vmatmul.mubr.f32.gmra.mrb[0].mxu0 %v501
        %v569 = vpop.f32.mrb[0].mxu0
        %v570 = vadd.f32 0.0, %v569
        %v571 = vpop.f32.mrb[0].mxu0
        %572 = vdwg.mxu0
        %v573 = vsub.f32 0.0, %v570
        %v574 = vmul.f32 %v573, 1.442695
        %v575 = vpow.pop %v574
        %v576 = vadd.f32 %v575, 1.0
        %v577 = vrcp.pop %v576
        %v578 = vsub.f32 %v391, %v413
        %580 = vset.pattern.permute.xlu0 0
        %581 = vperm.xlu0 %580, %v577
        %v582 = vpop.permute.xlu0 %581
        %v584 = vmul.f32 %v582, %v578
        %v585 = vadd.f32 %v413, %v584
        %586 = vst [vmem:[%s269] sm:$0xff] %v585
        %s587 = sand.u32 %s181, 1
        %s588 = scalar_lea.sflag [#allocation3], %s587
        %s589 = sand.u32 %s181, 1
        %s590 = smul.addr %s589, 8
        %s591 = scalar_lea.vmem [#allocation2], %s590
        // Predicated region
        $region49: #{tpu_custom_call.1} parent=47 // pred_check
          %p592 = pneg %p191
        $region50: #{tpu_custom_call.1} parent=47 // pred_check_branch
          %594 = sbr.rel (%p592) target = $region52
        $region51: #{tpu_custom_call.1} parent=47 // pred_region
          %s596 = ssub.s32 128, 128
          %597 = vsyncadd %s588, %s596
          %s598 = smul.addr %s21, 128
          %s599 = scalar_lea.hbm %s7, %s598
          %s601 = sshll.u32 %s591, 4
          %s602 = int_to_ptr.vmem [resolvable:$true] %s601
          %604 = dma.vmem_to_hbm [thread:$0]  %s602, 128, %s599, %s588
        $region52: #{tpu_custom_call.1} parent=47 // pred_fallthru
          _
      $region48: #{tpu_custom_call.1} parent=5 // pred_fallthru
        _
      %p605 = scmp.le.s32.totalorder 2, %s16
      // Predicated region
      $region53: #{tpu_custom_call.1} parent=5 // pred_check
        %p606 = pneg %p605
      $region54: #{tpu_custom_call.1} parent=5 // pred_check_branch
        %608 = sbr.rel (%p606) target = $region56
      $region55: #{tpu_custom_call.1} parent=5 // pred_region
        %s609 = ssub.s32 %s16, 2
        // Predicated region
        $region57: #{tpu_custom_call.1} parent=55 // pred_check
          %p610 = pneg %p197
        $region58: #{tpu_custom_call.1} parent=55 // pred_check_branch
          %612 = sbr.rel (%p610) target = $region60
        $region59: #{tpu_custom_call.1} parent=55 // pred_region
          %s613 = sand.u32 %s182, 1
          %s614 = scalar_lea.sflag [#allocation3], %s613
          %s615 = sand.u32 %s182, 1
          %s616 = smul.addr %s615, 8
          %s617 = scalar_lea.vmem [#allocation2], %s616
          %618 = dma.done %s614, 128
        $region60: #{tpu_custom_call.1} parent=55 // pred_fallthru
          _
      $region56: #{tpu_custom_call.1} parent=5 // pred_fallthru
        _
    $region6: #{tpu_custom_call.1} parent=1 // loop_footer
      %s20 = sadd.s32 1, %s16
    $region7: #{tpu_custom_call.1} parent=1 // loop_footer_branch
      %15 = sbr.rel target = $region3
    $region8: #{tpu_custom_call.1} parent=1 // loop_exit
      _
    %619 = vsyncpa [#allocation3], 1
    %s620 = scalar_lea.sflag [#allocation3], 1
    %621 = vsyncpa %s620, 1

</llo_original>
